<compile_context>
chip_gen: v7x
topology: tpu7x:2x2x1
jax: 0.10.0
libtpu: 0.0.40
codegen_flags: <defaults>
</compile_context>

<pallas_src>
import jax
import jax.numpy as jnp
from jax.experimental import pallas as pl
from jax.experimental.pallas import tpu as pltpu

LANE = 128     # TPU vreg lane width
SUBLANE = 8    # TPU vreg sublane width


def _round_up(n: int, m: int) -> int:
    return ((n + m - 1) // m) * m


def qnetwork_kernel(x_ref, w1_ref, b1_ref, w2_ref, b2_ref, w3_ref, b3_ref, o_ref):
    """One batch tile: y = relu(relu(relu(x@W1+b1)@W2+b2)@W3+b3).

    x/W* are bf16 (MXU-native), accumulation is f32 (preferred_element_type),
    bias add + ReLU are done in f32, output is stored in f32.
    """
    h1 = jnp.dot(x_ref[...], w1_ref[...], preferred_element_type=jnp.float32)
    h1 = jnp.maximum(h1 + b1_ref[...], 0.0)
    h2 = jnp.dot(h1.astype(jnp.bfloat16), w2_ref[...],
                 preferred_element_type=jnp.float32)
    h2 = jnp.maximum(h2 + b2_ref[...], 0.0)
    h3 = jnp.dot(h2.astype(jnp.bfloat16), w3_ref[...],
                 preferred_element_type=jnp.float32)
    o_ref[...] = jnp.maximum(h3 + b3_ref[...], 0.0).astype(o_ref.dtype)


def prepare_params(params):
    """Pad + cast the weights/biases ONCE.  Cache the result across forward calls.

    Layout (all stored as (in, out) so the kernel computes x @ W):
      W1: (Ds, H1) bf16   b1: (1, H1) f32      Ds = round_up(state_size, 8)
      W2: (H1, H2) bf16   b2: (1, H2) f32      H* = round_up(hidden*, 128)
      W3: (H2, A)  bf16   b3: (1, A)  f32      A  = action_size (real width)
    Zero padding is exact for Linear+ReLU: padded input lanes hit zero weight
    rows; padded hidden lanes get bias 0 -> relu 0 -> zero weight rows next layer.
    """
    state_size, hidden1 = params["W1"].shape
    hidden2 = params["W2"].shape[1]
    action_size = params["W3"].shape[1]

    Ds = _round_up(state_size, SUBLANE)
    H1 = _round_up(hidden1, LANE)
    H2 = _round_up(hidden2, LANE)
    A = action_size  # keep real output width; block last dim == full array dim

    def pad2(a, rows, cols, dtype):
        a = a.astype(dtype)
        pr, pc = rows - a.shape[0], cols - a.shape[1]
        if pr or pc:
            a = jnp.pad(a, ((0, pr), (0, pc)))
        return a

    return {
        "W1": pad2(params["W1"], Ds, H1, jnp.bfloat16),
        "b1": pad2(params["b1"], 1, H1, jnp.float32),
        "W2": pad2(params["W2"], H1, H2, jnp.bfloat16),
        "b2": pad2(params["b2"], 1, H2, jnp.float32),
        "W3": pad2(params["W3"], H2, A, jnp.bfloat16),
        "b3": pad2(params["b3"], 1, A, jnp.float32),
    }


def _choose_batch_tile(B: int, block_b: int):
    """Batch tile is always a multiple of 8; prefer >= 2 tiles so v7x's second
    TensorCore gets work on the 'parallel' batch axis."""
    block_b = _round_up(max(int(block_b), SUBLANE), SUBLANE)
    bp_min = _round_up(B, SUBLANE)
    if bp_min <= block_b:
        if bp_min >= 2 * SUBLANE:
            tb = _round_up((bp_min + 1) // 2, SUBLANE)   # split in two tiles
        else:
            tb = bp_min
    else:
        tb = block_b
    bp = _round_up(B, tb)
    return tb, bp


def qnetwork_forward(x, prepared, *, block_b: int = 1024):
    """x: (B, state_size) float32.  prepared: output of prepare_params()."""
    B, state_size = x.shape
    Ds, H1 = prepared["W1"].shape
    H2 = prepared["W2"].shape[1]
    A = prepared["W3"].shape[1]

    tb, Bp = _choose_batch_tile(B, block_b)
    nb = Bp // tb

    # Only pad the batch to a tile multiple and the feature dim to Ds (<= +7);
    # cast the streamed activations to bf16 (halves the x DMA).
    xp = x.astype(jnp.bfloat16)
    if (Bp - B) or (Ds - state_size):
        xp = jnp.pad(xp, ((0, Bp - B), (0, Ds - state_size)))

    def resident(shape):
        # Full array, same block index every grid step -> stays VMEM-resident.
        return pl.BlockSpec(shape, lambda i: (0, 0))

    in_specs = [
        pl.BlockSpec((tb, Ds), lambda i: (i, 0)),   # activations: streamed per batch tile
        resident((Ds, H1)), resident((1, H1)),
        resident((H1, H2)), resident((1, H2)),
        resident((H2, A)), resident((1, A)),
    ]
    out_spec = pl.BlockSpec((tb, A), lambda i: (i, 0))

    flops = 2 * Bp * (Ds * H1 + H1 * H2 + H2 * A)
    bytes_accessed = (2 * (Bp * Ds + Ds * H1 + H1 * H2 + H2 * A)   # bf16 streams/weights
                      + 4 * (H1 + H2 + A + Bp * A))                # f32 biases + output

    out = pl.pallas_call(
        qnetwork_kernel,
        out_shape=jax.ShapeDtypeStruct((Bp, A), jnp.float32),
        grid=(nb,),
        in_specs=in_specs,
        out_specs=out_spec,
        compiler_params=pltpu.CompilerParams(
            dimension_semantics=("parallel",),   # batch tiles shard across TCs on v7x
        ),
        cost_estimate=pl.CostEstimate(
            flops=flops, transcendentals=0, bytes_accessed=bytes_accessed),
    )(xp, prepared["W1"], prepared["b1"], prepared["W2"], prepared["b2"],
      prepared["W3"], prepared["b3"])

    if Bp != B:
        out = out[:B]
    return out


def init_params(key, state_size, action_size, hidden1=64, hidden2=64):
    """Deterministic init mimicking nn.Linear default (uniform +/- 1/sqrt(fan_in))."""
    keys = jax.random.split(key, 6)

    def linear_init(kw, kb, fan_in, fan_out):
        bound = 1.0 / jnp.sqrt(fan_in)
        W = jax.random.uniform(kw, (fan_in, fan_out), jnp.float32, -bound, bound)
        b = jax.random.uniform(kb, (1, fan_out), jnp.float32, -bound, bound)
        return W, b

    W1, b1 = linear_init(keys[0], keys[1], state_size, hidden1)
    W2, b2 = linear_init(keys[2], keys[3], hidden1, hidden2)
    W3, b3 = linear_init(keys[4], keys[5], hidden2, action_size)
    return {"W1": W1, "b1": b1, "W2": W2, "b2": b2, "W3": W3, "b3": b3}


if __name__ == "__main__":
    state_size = 8
    action_size = 4
    batch = 16          # exercises 2 batch tiles (tb=8, grid=(2,))

    key = jax.random.PRNGKey(0)
    k_params, k_x = jax.random.split(key)

    params = init_params(k_params, state_size, action_size)
    prepared = prepare_params(params)          # pad/cast once, reuse every call
    x = jax.random.normal(k_x, (batch, state_size), dtype=jnp.float32)

    out = jax.block_until_ready(qnetwork_forward(x, prepared))

    # Reference in plain f32 JAX (same math as the PyTorch module, including the
    # ReLU on the final layer).  Loose tolerance accounts for the deliberate
    # bf16 matmul inputs (f32 accumulation keeps the error ~<1%).
    h = jnp.maximum(x @ params["W1"] + params["b1"], 0.0)
    h = jnp.maximum(h @ params["W2"] + params["b2"], 0.0)
    ref = jnp.maximum(h @ params["W3"] + params["b3"], 0.0)
    assert out.shape == (batch, action_size)
    assert jnp.allclose(out, ref, atol=5e-2, rtol=5e-2), "mismatch vs reference"

    print("KERNEL_OK")
</pallas_src>

<mosaic_0001>
module attributes {stable_mosaic.version = 11 : i64} {
  func.func @qnetwork_kernel(%arg0: i32, %arg1: memref<8x8xbf16, #tpu.memory_space<vmem>>, %arg2: memref<8x128xbf16, #tpu.memory_space<vmem>>, %arg3: memref<1x128xf32, #tpu.memory_space<vmem>>, %arg4: memref<128x128xbf16, #tpu.memory_space<vmem>>, %arg5: memref<1x128xf32, #tpu.memory_space<vmem>>, %arg6: memref<128x4xbf16, #tpu.memory_space<vmem>>, %arg7: memref<1x4xf32, #tpu.memory_space<vmem>>, %arg8: memref<8x4xf32, #tpu.memory_space<vmem>>) attributes {dimension_semantics = [#tpu.dimension_semantics<parallel>], iteration_bounds = array<i64: 2>, scalar_prefetch = 0 : i64, scratch_operands = 0 : i64, tpu.core_type = #tpu.core_type<tc>, window_params = [{transform_indices = @transform_0, window_bounds = array<i64: 8, 8>}, {pipeline_mode = #tpu.pipeline_mode<synchronous>, transform_indices = @transform_1, window_bounds = array<i64: 8, 128>}, {pipeline_mode = #tpu.pipeline_mode<synchronous>, transform_indices = @transform_2, window_bounds = array<i64: 1, 128>}, {pipeline_mode = #tpu.pipeline_mode<synchronous>, transform_indices = @transform_3, window_bounds = array<i64: 128, 128>}, {pipeline_mode = #tpu.pipeline_mode<synchronous>, transform_indices = @transform_4, window_bounds = array<i64: 1, 128>}, {pipeline_mode = #tpu.pipeline_mode<synchronous>, transform_indices = @transform_5, window_bounds = array<i64: 128, 4>}, {pipeline_mode = #tpu.pipeline_mode<synchronous>, transform_indices = @transform_6, window_bounds = array<i64: 1, 4>}, {transform_indices = @transform_7, window_bounds = array<i64: 8, 4>}]} {
    %c0 = arith.constant 0 : index
    %c0_0 = arith.constant 0 : index
    %0 = vector.load %arg1[%c0, %c0_0] : memref<8x8xbf16, #tpu.memory_space<vmem>>, vector<8x8xbf16>
    %c0_1 = arith.constant 0 : index
    %c0_2 = arith.constant 0 : index
    %1 = vector.load %arg2[%c0_1, %c0_2] : memref<8x128xbf16, #tpu.memory_space<vmem>>, vector<8x128xbf16>
    %cst = arith.constant dense<0.000000e+00> : vector<8x128xf32>
    %2 = tpu.matmul %0, %1, %cst {dimension_numbers = #tpu.dot_dimension_numbers<[1], [0], [0], [1], [0, 0, 1, 1], [], []>} : vector<8x8xbf16>, vector<8x128xbf16>, vector<8x128xf32> -> vector<8x128xf32>
    %c0_3 = arith.constant 0 : index
    %c0_4 = arith.constant 0 : index
    %3 = vector.load %arg3[%c0_3, %c0_4] : memref<1x128xf32, #tpu.memory_space<vmem>>, vector<1x128xf32>
    %4 = vector.broadcast %3 : vector<1x128xf32> to vector<8x128xf32>
    %5 = arith.addf %2, %4 : vector<8x128xf32>
    %cst_5 = arith.constant 0.000000e+00 : f32
    %6 = vector.broadcast %cst_5 : f32 to vector<8x128xf32>
    %7 = arith.maximumf %5, %6 : vector<8x128xf32>
    %8 = arith.truncf %7 : vector<8x128xf32> to vector<8x128xbf16>
    %c0_6 = arith.constant 0 : index
    %c0_7 = arith.constant 0 : index
    %9 = vector.load %arg4[%c0_6, %c0_7] : memref<128x128xbf16, #tpu.memory_space<vmem>>, vector<128x128xbf16>
    %cst_8 = arith.constant dense<0.000000e+00> : vector<8x128xf32>
    %10 = tpu.matmul %8, %9, %cst_8 {dimension_numbers = #tpu.dot_dimension_numbers<[1], [0], [0], [1], [0, 0, 1, 1], [], []>} : vector<8x128xbf16>, vector<128x128xbf16>, vector<8x128xf32> -> vector<8x128xf32>
    %c0_9 = arith.constant 0 : index
    %c0_10 = arith.constant 0 : index
    %11 = vector.load %arg5[%c0_9, %c0_10] : memref<1x128xf32, #tpu.memory_space<vmem>>, vector<1x128xf32>
    %12 = vector.broadcast %11 : vector<1x128xf32> to vector<8x128xf32>
    %13 = arith.addf %10, %12 : vector<8x128xf32>
    %cst_11 = arith.constant 0.000000e+00 : f32
    %14 = vector.broadcast %cst_11 : f32 to vector<8x128xf32>
    %15 = arith.maximumf %13, %14 : vector<8x128xf32>
    %16 = arith.truncf %15 : vector<8x128xf32> to vector<8x128xbf16>
    %c0_12 = arith.constant 0 : index
    %c0_13 = arith.constant 0 : index
    %17 = vector.load %arg6[%c0_12, %c0_13] : memref<128x4xbf16, #tpu.memory_space<vmem>>, vector<128x4xbf16>
    %cst_14 = arith.constant dense<0.000000e+00> : vector<8x4xf32>
    %18 = tpu.matmul %16, %17, %cst_14 {dimension_numbers = #tpu.dot_dimension_numbers<[1], [0], [0], [1], [0, 0, 1, 1], [], []>} : vector<8x128xbf16>, vector<128x4xbf16>, vector<8x4xf32> -> vector<8x4xf32>
    %c0_15 = arith.constant 0 : index
    %c0_16 = arith.constant 0 : index
    %19 = vector.load %arg7[%c0_15, %c0_16] : memref<1x4xf32, #tpu.memory_space<vmem>>, vector<1x4xf32>
    %20 = vector.broadcast %19 : vector<1x4xf32> to vector<8x4xf32>
    %21 = arith.addf %18, %20 : vector<8x4xf32>
    %cst_17 = arith.constant 0.000000e+00 : f32
    %22 = vector.broadcast %cst_17 : f32 to vector<8x4xf32>
    %23 = arith.maximumf %21, %22 : vector<8x4xf32>
    %c0_18 = arith.constant 0 : index
    %c0_19 = arith.constant 0 : index
    %24 = vector.load %arg8[%c0_18, %c0_19] : memref<8x4xf32, #tpu.memory_space<vmem>>, vector<8x4xf32>
    tpu.vector_store %arg8[%c0_18, %c0_19], %23 {strides = array<i32>} : memref<8x4xf32, #tpu.memory_space<vmem>>, vector<8x4xf32>,
    return
  }
  func.func @transform_0(%arg0: i32) -> (i32, i32) {
    %c0_i32 = arith.constant 0 : i32
    %c0_i32_0 = arith.constant 0 : i32
    return %arg0, %c0_i32 : i32, i32
  }
  func.func @transform_1(%arg0: i32) -> (i32, i32) {
    %c0_i32 = arith.constant 0 : i32
    %c0_i32_0 = arith.constant 0 : i32
    %c0_i32_1 = arith.constant 0 : i32
    return %c0_i32, %c0_i32_0 : i32, i32
  }
  func.func @transform_2(%arg0: i32) -> (i32, i32) {
    %c0_i32 = arith.constant 0 : i32
    %c0_i32_0 = arith.constant 0 : i32
    %c0_i32_1 = arith.constant 0 : i32
    return %c0_i32, %c0_i32_0 : i32, i32
  }
  func.func @transform_3(%arg0: i32) -> (i32, i32) {
    %c0_i32 = arith.constant 0 : i32
    %c0_i32_0 = arith.constant 0 : i32
    %c0_i32_1 = arith.constant 0 : i32
    return %c0_i32, %c0_i32_0 : i32, i32
  }
  func.func @transform_4(%arg0: i32) -> (i32, i32) {
    %c0_i32 = arith.constant 0 : i32
    %c0_i32_0 = arith.constant 0 : i32
    %c0_i32_1 = arith.constant 0 : i32
    return %c0_i32, %c0_i32_0 : i32, i32
  }
  func.func @transform_5(%arg0: i32) -> (i32, i32) {
    %c0_i32 = arith.constant 0 : i32
    %c0_i32_0 = arith.constant 0 : i32
    %c0_i32_1 = arith.constant 0 : i32
    return %c0_i32, %c0_i32_0 : i32, i32
  }
  func.func @transform_6(%arg0: i32) -> (i32, i32) {
    %c0_i32 = arith.constant 0 : i32
    %c0_i32_0 = arith.constant 0 : i32
    %c0_i32_1 = arith.constant 0 : i32
    return %c0_i32, %c0_i32_0 : i32, i32
  }
  func.func @transform_7(%arg0: i32) -> (i32, i32) {
    %c0_i32 = arith.constant 0 : i32
    %c0_i32_0 = arith.constant 0 : i32
    return %arg0, %c0_i32 : i32, i32
  }
}

</mosaic_0001>

<llo_original>
// kernel: tpu_custom_call.1
$region0: #{tpu_custom_call.1}
  #allocation0 [shape = 'u32[]', space=smem, size = 0x4, offset = 0x4, fixed_abs, tag = 'smem constant byte address 0x4 - core index']
  #allocation1 [shape = 'u32[144,128]{1,0:T(1,128)}', space=vmem, size = 0x12000, scoped, tag = 'internal scratch']
  %s0 = inlined_call_operand.vmem [shape: bf16[16,8], index: 0, kind: input, shape index: {}]
  %s1 = inlined_call_operand.vmem [shape: bf16[8,128], index: 1, kind: input, shape index: {}]
  %s2 = inlined_call_operand.vmem [shape: f32[1,128], index: 2, kind: input, shape index: {}]
  %s3 = inlined_call_operand.vmem [shape: bf16[128,128], index: 3, kind: input, shape index: {}]
  %s4 = inlined_call_operand.vmem [shape: f32[1,128], index: 4, kind: input, shape index: {}]
  %s5 = inlined_call_operand.vmem [shape: bf16[128,4], index: 5, kind: input, shape index: {}]
  %s6 = inlined_call_operand.vmem [shape: f32[1,4], index: 6, kind: input, shape index: {}]
  %s7 = inlined_call_operand.vmem [shape: f32[16,4], index: 7, kind: output, shape index: {}]
  %s8 = sld [smem:[#allocation0]]
  $region61: #{tpu_custom_call.1} parent=0
    _
  %s10 = ssub.s32 1, %s8
  %s11 = scalar_select 0, %s10, %s8
  loop: start=0, step=1, limit=4
  $region2: #{tpu_custom_call.1} parent=0 // loop_pre_header
    _
  $region3: #{tpu_custom_call.1} parent=0 // loop_header
    %s13 = sphi 0, %s17
    %p14 = scmp.ge.s32.totalorder %s13, 4
    %s23 = sphi 0, %s25
    %s26 = sphi 0, %s23
    %s27 = sphi 0, %s26
    %s43 = sphi 0, %s27
    %s47 = sphi 0, %s47
    %s49 = sphi 0, %s47
    %s50 = sphi 0, %s49
    %s64 = sphi 0, %s50
    %s68 = sphi 0, %s68
    %s70 = sphi 0, %s68
    %s71 = sphi 0, %s70
    %s85 = sphi 0, %s71
    %s89 = sphi 0, %s89
    %s91 = sphi 0, %s89
    %s92 = sphi 0, %s91
    %s106 = sphi 0, %s92
    %s110 = sphi 0, %s110
    %s112 = sphi 0, %s110
    %s113 = sphi 0, %s112
    %s127 = sphi 0, %s113
    %s131 = sphi 0, %s131
    %s133 = sphi 0, %s131
    %s134 = sphi 0, %s133
    %s148 = sphi 0, %s134
    %s152 = sphi 0, %s152
    %s154 = sphi 0, %s152
    %s155 = sphi 0, %s154
    %s169 = sphi 0, %s155
    %s175 = sphi 0, %s177
    %s178 = sphi 0, %s175
    %s179 = sphi 0, %s178
    %s195 = sphi 0, %s179
  $region4: #{tpu_custom_call.1} parent=0 // loop_header_branch
    %16 = sbr.rel (%p14) target = $region8
  $region5: #{tpu_custom_call.1} parent=0 // loop_body
    %s18 = ssub.s32 %s13, 1
    %s19 = ssub.s32 %s13, 2
    %s20 = sadd.s32 %s13, 1
    %s21 = ssub.s32 %s13, %s20
    %p22 = scmp.eq.s32.totalorder %s21, 0
    %s24 = sadd.s32 %s23, 1
    %s25 = scalar_select %p22, %s23, %s24
    %p28 = pneg %p22
    %p29 = scmp.eq.s32.totalorder %s13, 1
    %p30 = por %p28, %p29
    %p31 = scmp.ne.s32.totalorder %s23, %s26
    %p32 = scmp.eq.s32.totalorder %s13, 0
    %p33 = por %p31, %p32
    %p34 = scmp.ne.s32.totalorder %s23, %s26
    %p35 = scmp.eq.s32.totalorder %s18, 1
    %p36 = por %p34, %p35
    %p37 = scmp.ne.s32.totalorder %s26, %s27
    %p38 = scmp.eq.s32.totalorder %s18, 0
    %p39 = por %p37, %p38
    %p40 = scmp.ne.s32.totalorder %s26, %s27
    %p41 = scmp.eq.s32.totalorder %s19, 1
    %p42 = por %p40, %p41
    %p44 = scmp.ne.s32.totalorder %s27, %s43
    %p45 = scmp.eq.s32.totalorder %s19, 0
    %p46 = por %p44, %p45
    %s48 = sadd.s32 %s47, 1
    %p51 = scmp.eq.s32.totalorder %s13, 1
    %p52 = scmp.ne.s32.totalorder %s47, %s49
    %p53 = scmp.eq.s32.totalorder %s13, 0
    %p54 = por %p52, %p53
    %p55 = scmp.ne.s32.totalorder %s47, %s49
    %p56 = scmp.eq.s32.totalorder %s18, 1
    %p57 = por %p55, %p56
    %p58 = scmp.ne.s32.totalorder %s49, %s50
    %p59 = scmp.eq.s32.totalorder %s18, 0
    %p60 = por %p58, %p59
    %p61 = scmp.ne.s32.totalorder %s49, %s50
    %p62 = scmp.eq.s32.totalorder %s19, 1
    %p63 = por %p61, %p62
    %p65 = scmp.ne.s32.totalorder %s50, %s64
    %p66 = scmp.eq.s32.totalorder %s19, 0
    %p67 = por %p65, %p66
    %s69 = sadd.s32 %s68, 1
    %p72 = scmp.eq.s32.totalorder %s13, 1
    %p73 = scmp.ne.s32.totalorder %s68, %s70
    %p74 = scmp.eq.s32.totalorder %s13, 0
    %p75 = por %p73, %p74
    %p76 = scmp.ne.s32.totalorder %s68, %s70
    %p77 = scmp.eq.s32.totalorder %s18, 1
    %p78 = por %p76, %p77
    %p79 = scmp.ne.s32.totalorder %s70, %s71
    %p80 = scmp.eq.s32.totalorder %s18, 0
    %p81 = por %p79, %p80
    %p82 = scmp.ne.s32.totalorder %s70, %s71
    %p83 = scmp.eq.s32.totalorder %s19, 1
    %p84 = por %p82, %p83
    %p86 = scmp.ne.s32.totalorder %s71, %s85
    %p87 = scmp.eq.s32.totalorder %s19, 0
    %p88 = por %p86, %p87
    %s90 = sadd.s32 %s89, 1
    %p93 = scmp.eq.s32.totalorder %s13, 1
    %p94 = scmp.ne.s32.totalorder %s89, %s91
    %p95 = scmp.eq.s32.totalorder %s13, 0
    %p96 = por %p94, %p95
    %p97 = scmp.ne.s32.totalorder %s89, %s91
    %p98 = scmp.eq.s32.totalorder %s18, 1
    %p99 = por %p97, %p98
    %p100 = scmp.ne.s32.totalorder %s91, %s92
    %p101 = scmp.eq.s32.totalorder %s18, 0
    %p102 = por %p100, %p101
    %p103 = scmp.ne.s32.totalorder %s91, %s92
    %p104 = scmp.eq.s32.totalorder %s19, 1
    %p105 = por %p103, %p104
    %p107 = scmp.ne.s32.totalorder %s92, %s106
    %p108 = scmp.eq.s32.totalorder %s19, 0
    %p109 = por %p107, %p108
    %s111 = sadd.s32 %s110, 1
    %p114 = scmp.eq.s32.totalorder %s13, 1
    %p115 = scmp.ne.s32.totalorder %s110, %s112
    %p116 = scmp.eq.s32.totalorder %s13, 0
    %p117 = por %p115, %p116
    %p118 = scmp.ne.s32.totalorder %s110, %s112
    %p119 = scmp.eq.s32.totalorder %s18, 1
    %p120 = por %p118, %p119
    %p121 = scmp.ne.s32.totalorder %s112, %s113
    %p122 = scmp.eq.s32.totalorder %s18, 0
    %p123 = por %p121, %p122
    %p124 = scmp.ne.s32.totalorder %s112, %s113
    %p125 = scmp.eq.s32.totalorder %s19, 1
    %p126 = por %p124, %p125
    %p128 = scmp.ne.s32.totalorder %s113, %s127
    %p129 = scmp.eq.s32.totalorder %s19, 0
    %p130 = por %p128, %p129
    %s132 = sadd.s32 %s131, 1
    %p135 = scmp.eq.s32.totalorder %s13, 1
    %p136 = scmp.ne.s32.totalorder %s131, %s133
    %p137 = scmp.eq.s32.totalorder %s13, 0
    %p138 = por %p136, %p137
    %p139 = scmp.ne.s32.totalorder %s131, %s133
    %p140 = scmp.eq.s32.totalorder %s18, 1
    %p141 = por %p139, %p140
    %p142 = scmp.ne.s32.totalorder %s133, %s134
    %p143 = scmp.eq.s32.totalorder %s18, 0
    %p144 = por %p142, %p143
    %p145 = scmp.ne.s32.totalorder %s133, %s134
    %p146 = scmp.eq.s32.totalorder %s19, 1
    %p147 = por %p145, %p146
    %p149 = scmp.ne.s32.totalorder %s134, %s148
    %p150 = scmp.eq.s32.totalorder %s19, 0
    %p151 = por %p149, %p150
    %s153 = sadd.s32 %s152, 1
    %p156 = scmp.eq.s32.totalorder %s13, 1
    %p157 = scmp.ne.s32.totalorder %s152, %s154
    %p158 = scmp.eq.s32.totalorder %s13, 0
    %p159 = por %p157, %p158
    %p160 = scmp.ne.s32.totalorder %s152, %s154
    %p161 = scmp.eq.s32.totalorder %s18, 1
    %p162 = por %p160, %p161
    %p163 = scmp.ne.s32.totalorder %s154, %s155
    %p164 = scmp.eq.s32.totalorder %s18, 0
    %p165 = por %p163, %p164
    %p166 = scmp.ne.s32.totalorder %s154, %s155
    %p167 = scmp.eq.s32.totalorder %s19, 1
    %p168 = por %p166, %p167
    %p170 = scmp.ne.s32.totalorder %s155, %s169
    %p171 = scmp.eq.s32.totalorder %s19, 0
    %p172 = por %p170, %p171
    %s173 = ssub.s32 %s13, %s20
    %p174 = scmp.eq.s32.totalorder %s173, 0
    %s176 = sadd.s32 %s175, 1
    %s177 = scalar_select %p174, %s175, %s176
    %p180 = pneg %p174
    %p181 = scmp.eq.s32.totalorder %s13, 1
    %p182 = por %p180, %p181
    %p183 = scmp.ne.s32.totalorder %s175, %s178
    %p184 = scmp.eq.s32.totalorder %s13, 0
    %p185 = por %p183, %p184
    %p186 = scmp.ne.s32.totalorder %s175, %s178
    %p187 = scmp.eq.s32.totalorder %s18, 1
    %p188 = por %p186, %p187
    %p189 = scmp.ne.s32.totalorder %s178, %s179
    %p190 = scmp.eq.s32.totalorder %s18, 0
    %p191 = por %p189, %p190
    %p192 = scmp.ne.s32.totalorder %s178, %s179
    %p193 = scmp.eq.s32.totalorder %s19, 1
    %p194 = por %p192, %p193
    %p196 = scmp.ne.s32.totalorder %s179, %s195
    %p197 = scmp.eq.s32.totalorder %s19, 0
    %p198 = por %p196, %p197
    %p199 = scmp.le.s32.totalorder 1, %s13
    %p200 = scmp.lt.s32.totalorder %s13, 3
    %p201 = pnand %p199, %p200
    %p202 = pneg %p201
    // Predicated region
    $region9: #{tpu_custom_call.1} parent=5 // pred_check
      _
    $region10: #{tpu_custom_call.1} parent=5 // pred_check_branch
      %204 = sbr.rel (%p201) target = $region12
    $region11: #{tpu_custom_call.1} parent=5 // pred_region
      %s205 = ssub.s32 %s13, 1
      // Predicated region
      $region13: #{tpu_custom_call.1} parent=11 // pred_check
        %p206 = pneg %p60
      $region14: #{tpu_custom_call.1} parent=11 // pred_check_branch
        %208 = sbr.rel (%p206) target = $region16
      $region15: #{tpu_custom_call.1} parent=11 // pred_region
        _
      $region16: #{tpu_custom_call.1} parent=11 // pred_fallthru
        _
      // Predicated region
      $region17: #{tpu_custom_call.1} parent=11 // pred_check
        %p209 = pneg %p81
      $region18: #{tpu_custom_call.1} parent=11 // pred_check_branch
        %211 = sbr.rel (%p209) target = $region20
      $region19: #{tpu_custom_call.1} parent=11 // pred_region
        _
      $region20: #{tpu_custom_call.1} parent=11 // pred_fallthru
        _
      // Predicated region
      $region21: #{tpu_custom_call.1} parent=11 // pred_check
        %p212 = pneg %p102
      $region22: #{tpu_custom_call.1} parent=11 // pred_check_branch
        %214 = sbr.rel (%p212) target = $region24
      $region23: #{tpu_custom_call.1} parent=11 // pred_region
        _
      $region24: #{tpu_custom_call.1} parent=11 // pred_fallthru
        _
      // Predicated region
      $region25: #{tpu_custom_call.1} parent=11 // pred_check
        %p215 = pneg %p123
      $region26: #{tpu_custom_call.1} parent=11 // pred_check_branch
        %217 = sbr.rel (%p215) target = $region28
      $region27: #{tpu_custom_call.1} parent=11 // pred_region
        _
      $region28: #{tpu_custom_call.1} parent=11 // pred_fallthru
        _
      // Predicated region
      $region29: #{tpu_custom_call.1} parent=11 // pred_check
        %p218 = pneg %p144
      $region30: #{tpu_custom_call.1} parent=11 // pred_check_branch
        %220 = sbr.rel (%p218) target = $region32
      $region31: #{tpu_custom_call.1} parent=11 // pred_region
        _
      $region32: #{tpu_custom_call.1} parent=11 // pred_fallthru
        _
      // Predicated region
      $region33: #{tpu_custom_call.1} parent=11 // pred_check
        %p221 = pneg %p165
      $region34: #{tpu_custom_call.1} parent=11 // pred_check_branch
        %223 = sbr.rel (%p221) target = $region36
      $region35: #{tpu_custom_call.1} parent=11 // pred_region
        _
      $region36: #{tpu_custom_call.1} parent=11 // pred_fallthru
        _
    $region12: #{tpu_custom_call.1} parent=5 // pred_fallthru
      _
    %p224 = scmp.lt.s32.totalorder %s13, 2
    // Predicated region
    $region37: #{tpu_custom_call.1} parent=5 // pred_check
      %p225 = pneg %p224
    $region38: #{tpu_custom_call.1} parent=5 // pred_check_branch
      %227 = sbr.rel (%p225) target = $region40
    $region39: #{tpu_custom_call.1} parent=5 // pred_region
      // Predicated region
      $region41: #{tpu_custom_call.1} parent=39 // pred_check
        %p228 = pneg %p33
      $region42: #{tpu_custom_call.1} parent=39 // pred_check_branch
        %230 = sbr.rel (%p228) target = $region44
      $region43: #{tpu_custom_call.1} parent=39 // pred_region
        %p231 = scmp.lt.s32.totalorder %s13, 1
        %s232 = scalar_select %p231, %s13, 1
        %s233 = smul.addr %s232, 4
        %s234 = scalar_lea.vmem %s0, %s233
      $region44: #{tpu_custom_call.1} parent=39 // pred_fallthru
        _
    $region40: #{tpu_custom_call.1} parent=5 // pred_fallthru
      _
    %p235 = scmp.le.s32.totalorder 1, %s13
    %p236 = scmp.lt.s32.totalorder %s13, 3
    %p237 = pnand %p235, %p236
    %p238 = pneg %p237
    // Predicated region
    $region45: #{tpu_custom_call.1} parent=5 // pred_check
      _
    $region46: #{tpu_custom_call.1} parent=5 // pred_check_branch
      %240 = sbr.rel (%p237) target = $region48
    $region47: #{tpu_custom_call.1} parent=5 // pred_region
      %s241 = ssub.s32 %s13, 1
      %p242 = scmp.lt.s32.totalorder %s18, 1
      %s243 = scalar_select %p242, %s18, 1
      %s244 = smul.addr %s243, 4
      %s245 = scalar_lea.vmem %s0, %s244
      %p246 = pneg %p39
      %p247 = pneg %p36
      %p248 = pneg %p60
      %p249 = pneg %p57
      %p250 = pneg %p81
      %p251 = pneg %p78
      %p252 = pneg %p102
      %p253 = pneg %p99
      %p254 = pneg %p123
      %p255 = pneg %p120
      %p256 = pneg %p144
      %p257 = pneg %p141
      %p258 = pneg %p165
      %p259 = pneg %p162
      %p260 = pneg %p191
      %p261 = pneg %p188
      %p262 = scmp.lt.s32.totalorder %s18, 1
      %s263 = scalar_select %p262, %s18, 1
      %s264 = smul.addr %s263, 8
      %s265 = scalar_lea.vmem %s7, %s264
      %p266 = scmp.lt.s32.totalorder %s18, 1
      %s267 = scalar_select %p266, %s18, 1
      %s268 = smul.addr %s267, 4
      %s269 = scalar_lea.vmem %s0, %s268
      %p270 = scmp.lt.s32.totalorder %s18, 1
      %s271 = scalar_select %p270, %s18, 1
      %s272 = smul.addr %s271, 8
      %s273 = scalar_lea.vmem %s7, %s272
      %v275 = vld [vmem:[%s269] sm:$0xf]
      %v276 = vld [vmem:[%s1] sm:$0xf]
      %v277 = vld [vmem:[%s2] sm:$0x1]
      %v279 = vlaneseq
      %v280 = vshrl.u32 %v279, 7
      %v281 = vsub.s32 0, %v280
      %v282 = vrot.slane %v277, %v281
      %vm284 = vcmask 64512
      %v286 = vsel %vm284, %v275, 0
      %vm288 = vcmask 1043456
      %v290 = vsel %vm288, %v276, 0
      %292 = vmatprep.subr.bf16.mxu0 0
      %293 = vmatpush1.bf16.msra.mxu0 %v290
      %294 = vmatprep.subr.bf16.mxu0 0
      %295 = vmatpush1.bf16.msra.mxu0 0
      %296 = vmatprep.subr.bf16.mxu0 0
      %297 = vmatpush1.bf16.msra.mxu0 0
      %298 = vmatprep.subr.bf16.mxu0 0
      %299 = vmatpush1.bf16.msra.mxu0 0
      %300 = vmatprep.subr.bf16.mxu0 0
      %301 = vmatpush1.bf16.msra.mxu0 0
      %302 = vmatprep.subr.bf16.mxu0 0
      %303 = vmatpush1.bf16.msra.mxu0 0
      %304 = vmatprep.subr.bf16.mxu0 0
      %305 = vmatpush1.bf16.msra.mxu0 0
      %306 = vmatprep.subr.bf16.mxu0 0
      %307 = vmatpush1.bf16.msra.mxu0 0
      %308 = vmatprep.subr.bf16.mxu0 0
      %309 = vmatpush1.bf16.msra.mxu0 0
      %310 = vmatprep.subr.bf16.mxu0 0
      %311 = vmatpush1.bf16.msra.mxu0 0
      %312 = vmatprep.subr.bf16.mxu0 0
      %313 = vmatpush1.bf16.msra.mxu0 0
      %314 = vmatprep.subr.bf16.mxu0 0
      %315 = vmatpush1.bf16.msra.mxu0 0
      %316 = vmatprep.subr.bf16.mxu0 0
      %317 = vmatpush1.bf16.msra.mxu0 0
      %318 = vmatprep.subr.bf16.mxu0 0
      %319 = vmatpush1.bf16.msra.mxu0 0
      %320 = vmatprep.subr.bf16.mxu0 0
      %321 = vmatpush1.bf16.msra.mxu0 0
      %322 = vmatprep.subr.bf16.mxu0 0
      %323 = vmatpush1.bf16.msra.mxu0 0
      %324 = vmatprep.mubr.bf16.mxu0 0
      %325 = vmatmul.mubr.bf16.gmra.mrb[0].mxu0 %v286
      %v326 = vpop.f32.mrb[0].mxu0
      %v327 = vadd.f32 %v282, %v326
      %v328 = vpop.f32.mrb[0].mxu0
      %v329 = vpop.f32.mrb[0].mxu0
      %v330 = vpop.f32.mrb[0].mxu0
      %331 = vdwg.mxu0
      %v332 = vmax.f32 %v327, 0.0
      %v333 = vpack.c.bf16 %v332, %v332
      %v334 = vld [vmem:[%s3] sm:$0xf]
      %v335 = vld [vmem:[%s3 + $0x4] sm:$0xf]
      %v336 = vld [vmem:[%s3 + $0x8] sm:$0xf]
      %v337 = vld [vmem:[%s3 + $0xc] sm:$0xf]
      %v338 = vld [vmem:[%s3 + $0x10] sm:$0xf]
      %v339 = vld [vmem:[%s3 + $0x14] sm:$0xf]
      %v340 = vld [vmem:[%s3 + $0x18] sm:$0xf]
      %v341 = vld [vmem:[%s3 + $0x1c] sm:$0xf]
      %v342 = vld [vmem:[%s3 + $0x20] sm:$0xf]
      %v343 = vld [vmem:[%s3 + $0x24] sm:$0xf]
      %v344 = vld [vmem:[%s3 + $0x28] sm:$0xf]
      %v345 = vld [vmem:[%s3 + $0x2c] sm:$0xf]
      %v346 = vld [vmem:[%s3 + $0x30] sm:$0xf]
      %v347 = vld [vmem:[%s3 + $0x34] sm:$0xf]
      %v348 = vld [vmem:[%s3 + $0x38] sm:$0xf]
      %v349 = vld [vmem:[%s3 + $0x3c] sm:$0xf]
      %v350 = vld [vmem:[%s4] sm:$0x1]
      %v352 = vlaneseq
      %v353 = vshrl.u32 %v352, 7
      %v354 = vsub.s32 0, %v353
      %v355 = vrot.slane %v350, %v354
      %v373 = vunpack.c.l.b16 %v334
      %v374 = vunpack.c.l.b16 %v335
      %v375 = vunpack.c.l.b16 %v336
      %v376 = vunpack.c.l.b16 %v337
      %v377 = vunpack.c.l.b16 %v338
      %v378 = vunpack.c.l.b16 %v339
      %v379 = vunpack.c.l.b16 %v340
      %v380 = vunpack.c.l.b16 %v341
      %v381 = vunpack.c.l.b16 %v342
      %v382 = vunpack.c.l.b16 %v343
      %v383 = vunpack.c.l.b16 %v344
      %v384 = vunpack.c.l.b16 %v345
      %v385 = vunpack.c.l.b16 %v346
      %v386 = vunpack.c.l.b16 %v347
      %v387 = vunpack.c.l.b16 %v348
      %v388 = vunpack.c.l.b16 %v349
      %v389 = vpack.c.b16 %v374, %v373
      %v390 = vpack.c.b16 %v376, %v375
      %v391 = vpack.c.b16 %v378, %v377
      %v392 = vpack.c.b16 %v380, %v379
      %v393 = vpack.c.b16 %v382, %v381
      %v394 = vpack.c.b16 %v384, %v383
      %v395 = vpack.c.b16 %v386, %v385
      %v396 = vpack.c.b16 %v388, %v387
      %405 = vmatprep.subr.bf16.mxu0 0
      %406 = vmatpush1.bf16.msra.mxu0 %v389
      %407 = vmatprep.subr.bf16.mxu0 0
      %408 = vmatpush1.bf16.msra.mxu0 %v390
      %409 = vmatprep.subr.bf16.mxu0 0
      %410 = vmatpush1.bf16.msra.mxu0 %v391
      %411 = vmatprep.subr.bf16.mxu0 0
      %412 = vmatpush1.bf16.msra.mxu0 %v392
      %413 = vmatprep.subr.bf16.mxu0 0
      %414 = vmatpush1.bf16.msra.mxu0 %v393
      %415 = vmatprep.subr.bf16.mxu0 0
      %416 = vmatpush1.bf16.msra.mxu0 %v394
      %417 = vmatprep.subr.bf16.mxu0 0
      %418 = vmatpush1.bf16.msra.mxu0 %v395
      %419 = vmatprep.subr.bf16.mxu0 0
      %420 = vmatpush1.bf16.msra.mxu0 %v396
      %421 = vmatprep.subr.bf16.mxu0 0
      %422 = vmatpush1.bf16.msra.mxu0 0
      %423 = vmatprep.subr.bf16.mxu0 0
      %424 = vmatpush1.bf16.msra.mxu0 0
      %425 = vmatprep.subr.bf16.mxu0 0
      %426 = vmatpush1.bf16.msra.mxu0 0
      %427 = vmatprep.subr.bf16.mxu0 0
      %428 = vmatpush1.bf16.msra.mxu0 0
      %429 = vmatprep.subr.bf16.mxu0 0
      %430 = vmatpush1.bf16.msra.mxu0 0
      %431 = vmatprep.subr.bf16.mxu0 0
      %432 = vmatpush1.bf16.msra.mxu0 0
      %433 = vmatprep.subr.bf16.mxu0 0
      %434 = vmatpush1.bf16.msra.mxu0 0
      %435 = vmatprep.subr.bf16.mxu0 0
      %436 = vmatpush1.bf16.msra.mxu0 0
      %437 = vmatprep.mubr.bf16.mxu0 0
      %438 = vmatmul.mubr.bf16.gmra.mrb[0].mxu0 %v333
      %v439 = vpop.f32.mrb[0].mxu0
      %v440 = vadd.f32 %v355, %v439
      %v441 = vpop.f32.mrb[0].mxu0
      %v442 = vpop.f32.mrb[0].mxu0
      %v443 = vpop.f32.mrb[0].mxu0
      %444 = vdwg.mxu0
      %v445 = vmax.f32 %v440, 0.0
      %v446 = vpack.c.bf16 %v445, %v445
      %v447 = vld [vmem:[%s5] sm:$0xf]
      %v448 = vld [vmem:[%s5 + $0x4] sm:$0xf]
      %v449 = vld [vmem:[%s5 + $0x8] sm:$0xf]
      %v450 = vld [vmem:[%s5 + $0xc] sm:$0xf]
      %v451 = vld [vmem:[%s5 + $0x10] sm:$0xf]
      %v452 = vld [vmem:[%s5 + $0x14] sm:$0xf]
      %v453 = vld [vmem:[%s5 + $0x18] sm:$0xf]
      %v454 = vld [vmem:[%s5 + $0x1c] sm:$0xf]
      %v455 = vld [vmem:[%s5 + $0x20] sm:$0xf]
      %v456 = vld [vmem:[%s5 + $0x24] sm:$0xf]
      %v457 = vld [vmem:[%s5 + $0x28] sm:$0xf]
      %v458 = vld [vmem:[%s5 + $0x2c] sm:$0xf]
      %v459 = vld [vmem:[%s5 + $0x30] sm:$0xf]
      %v460 = vld [vmem:[%s5 + $0x34] sm:$0xf]
      %v461 = vld [vmem:[%s5 + $0x38] sm:$0xf]
      %v462 = vld [vmem:[%s5 + $0x3c] sm:$0xf]
      %v463 = vld [vmem:[%s6] sm:$0x1]
      %v465 = vlaneseq
      %v466 = vshrl.u32 %v465, 7
      %v467 = vsub.s32 0, %v466
      %v468 = vrot.slane %v463, %v467
      %v486 = vunpack.c.l.b16 %v447
      %v487 = vunpack.c.l.b16 %v448
      %v488 = vunpack.c.l.b16 %v449
      %v489 = vunpack.c.l.b16 %v450
      %v490 = vunpack.c.l.b16 %v451
      %v491 = vunpack.c.l.b16 %v452
      %v492 = vunpack.c.l.b16 %v453
      %v493 = vunpack.c.l.b16 %v454
      %v494 = vunpack.c.l.b16 %v455
      %v495 = vunpack.c.l.b16 %v456
      %v496 = vunpack.c.l.b16 %v457
      %v497 = vunpack.c.l.b16 %v458
      %v498 = vunpack.c.l.b16 %v459
      %v499 = vunpack.c.l.b16 %v460
      %v500 = vunpack.c.l.b16 %v461
      %v501 = vunpack.c.l.b16 %v462
      %v502 = vpack.c.b16 %v487, %v486
      %v503 = vpack.c.b16 %v489, %v488
      %v504 = vpack.c.b16 %v491, %v490
      %v505 = vpack.c.b16 %v493, %v492
      %v506 = vpack.c.b16 %v495, %v494
      %v507 = vpack.c.b16 %v497, %v496
      %v508 = vpack.c.b16 %v499, %v498
      %v509 = vpack.c.b16 %v501, %v500
      %518 = vmatprep.subr.bf16.mxu0 0
      %519 = vmatpush1.bf16.msra.mxu0 %v502
      %520 = vmatprep.subr.bf16.mxu0 0
      %521 = vmatpush1.bf16.msra.mxu0 %v503
      %522 = vmatprep.subr.bf16.mxu0 0
      %523 = vmatpush1.bf16.msra.mxu0 %v504
      %524 = vmatprep.subr.bf16.mxu0 0
      %525 = vmatpush1.bf16.msra.mxu0 %v505
      %526 = vmatprep.subr.bf16.mxu0 0
      %527 = vmatpush1.bf16.msra.mxu0 %v506
      %528 = vmatprep.subr.bf16.mxu0 0
      %529 = vmatpush1.bf16.msra.mxu0 %v507
      %530 = vmatprep.subr.bf16.mxu0 0
      %531 = vmatpush1.bf16.msra.mxu0 %v508
      %532 = vmatprep.subr.bf16.mxu0 0
      %533 = vmatpush1.bf16.msra.mxu0 %v509
      %534 = vmatprep.subr.bf16.mxu0 0
      %535 = vmatpush1.bf16.msra.mxu0 0
      %536 = vmatprep.subr.bf16.mxu0 0
      %537 = vmatpush1.bf16.msra.mxu0 0
      %538 = vmatprep.subr.bf16.mxu0 0
      %539 = vmatpush1.bf16.msra.mxu0 0
      %540 = vmatprep.subr.bf16.mxu0 0
      %541 = vmatpush1.bf16.msra.mxu0 0
      %542 = vmatprep.subr.bf16.mxu0 0
      %543 = vmatpush1.bf16.msra.mxu0 0
      %544 = vmatprep.subr.bf16.mxu0 0
      %545 = vmatpush1.bf16.msra.mxu0 0
      %546 = vmatprep.subr.bf16.mxu0 0
      %547 = vmatpush1.bf16.msra.mxu0 0
      %548 = vmatprep.subr.bf16.mxu0 0
      %549 = vmatpush1.bf16.msra.mxu0 0
      %550 = vmatprep.mubr.bf16.mxu0 0
      %551 = vmatmul.mubr.bf16.gmra.mrb[0].mxu0 %v446
      %v552 = vpop.f32.mrb[0].mxu0
      %v553 = vadd.f32 %v468, %v552
      %v554 = vpop.f32.mrb[0].mxu0
      %v555 = vpop.f32.mrb[0].mxu0
      %v556 = vpop.f32.mrb[0].mxu0
      %557 = vdwg.mxu0
      %v558 = vmax.f32 %v553, 0.0
      %vm559 = vcmask 31744
      %560 = vst.msk [vmem:[%s273] sm:$0xff] %vm559, %v558
      %p561 = scmp.lt.s32.totalorder %s18, 1
      %s562 = scalar_select %p561, %s18, 1
      %s563 = smul.addr %s562, 8
      %s564 = scalar_lea.vmem %s7, %s563
      // Predicated region
      $region49: #{tpu_custom_call.1} parent=47 // pred_check
        %p565 = pneg %p188
      $region50: #{tpu_custom_call.1} parent=47 // pred_check_branch
        %567 = sbr.rel (%p565) target = $region52
      $region51: #{tpu_custom_call.1} parent=47 // pred_region
        _
      $region52: #{tpu_custom_call.1} parent=47 // pred_fallthru
        _
    $region48: #{tpu_custom_call.1} parent=5 // pred_fallthru
      _
    %p568 = scmp.le.s32.totalorder 2, %s13
    // Predicated region
    $region53: #{tpu_custom_call.1} parent=5 // pred_check
      %p569 = pneg %p568
    $region54: #{tpu_custom_call.1} parent=5 // pred_check_branch
      %571 = sbr.rel (%p569) target = $region56
    $region55: #{tpu_custom_call.1} parent=5 // pred_region
      %s572 = ssub.s32 %s13, 2
      // Predicated region
      $region57: #{tpu_custom_call.1} parent=55 // pred_check
        %p573 = pneg %p194
      $region58: #{tpu_custom_call.1} parent=55 // pred_check_branch
        %575 = sbr.rel (%p573) target = $region60
      $region59: #{tpu_custom_call.1} parent=55 // pred_region
        %p576 = scmp.lt.s32.totalorder %s19, 1
        %s577 = scalar_select %p576, %s19, 1
        %s578 = smul.addr %s577, 8
        %s579 = scalar_lea.vmem %s7, %s578
      $region60: #{tpu_custom_call.1} parent=55 // pred_fallthru
        _
    $region56: #{tpu_custom_call.1} parent=5 // pred_fallthru
      _
  $region6: #{tpu_custom_call.1} parent=0 // loop_footer
    %s17 = sadd.s32 1, %s13
  $region7: #{tpu_custom_call.1} parent=0 // loop_footer_branch
    %12 = sbr.rel target = $region3
  $region8: #{tpu_custom_call.1} parent=0 // loop_exit
    _

</llo_original>
